<compile_context>
chip_gen: v5e
topology: v5e:2x2
jax: 0.10.0
libtpu: 0.0.40
codegen_flags: <defaults>
</compile_context>

<pallas_src>
import functools

import numpy as np
import jax
import jax.numpy as jnp
from jax.experimental import pallas as pl
from jax.experimental.pallas import tpu as pltpu

_EPS_IN = 1e-5            # torch instance_norm default eps
_LANES = 128
_NSS_MAX_TILE_ROWS = 512  # cap on the NSS kernel per-step rows (TK = rows * 128)


def _largest_divisor_leq(n, cap):
    for d in range(min(n, cap), 0, -1):
        if n % d == 0:
            return d
    return 1


def _maybe_vmem_limit(est_bytes):
    """vmem_limit_bytes hint, only when the default scoped VMEM would be too small."""
    if est_bytes <= 12 * 1024 * 1024:       # fits even v5e's 16 MiB default scope
        return None
    try:
        cap = int(pltpu.get_tpu_info().vmem_capacity_bytes * 3 // 4)
    except Exception:                        # conservative fallback, safe on v5e/v6e/v7x
        cap = 48 * 1024 * 1024
    return int(min(max(est_bytes * 3 // 2, 32 * 1024 * 1024), cap))


# --------------------------------------------------------------------------------------
# Per-batch statistics kernel: sums / centered moments / max / KL / masked-MSE
# --------------------------------------------------------------------------------------
def _loss_stats_kernel(o_ref, t_ref, stats_ref, *, hw_real, padded):
    # o_ref / t_ref : (1, R, 128) lane-dense per-batch saliency / label tiles (native dtype)
    # stats_ref     : (1, 1, 128) per-batch scalars packed on lanes 0..7 (f32)
    o = o_ref[0].astype(jnp.float32)          # (R, 128)
    t = t_ref[0].astype(jnp.float32)          # (R, 128)
    R = o.shape[0]
    inv_n = jnp.float32(1.0 / hw_real)

    # ---- first-pass reductions (zero padding is neutral for the sums) ------------------
    sum_o = jnp.sum(o)
    sum_t = jnp.sum(t)

    if padded:
        # pad (< 128 zeros) lives entirely in the last row: mask only that tail row
        rem = hw_real % _LANES                # valid lanes in the last row (1..127)
        lane_tail = jax.lax.broadcasted_iota(jnp.int32, (1, _LANES), 1)
        tail = jnp.where(lane_tail < rem, o[R - 1:R, :], jnp.finfo(jnp.float32).min)
        o_max = jnp.max(tail)
        if R > 1:
            o_max = jnp.maximum(jnp.max(o[:R - 1, :]), o_max)
    else:
        o_max = jnp.max(o)

    mu_o = sum_o * inv_n
    mu_t = sum_t * inv_n

    # ---- centered second moments (robust variance / covariance for CC & NSS) -----------
    do = o - mu_o
    dt = t - mu_t
    sumsq_o = jnp.sum(do * do)
    sumsq_t = jnp.sum(dt * dt)
    cov = jnp.sum(do * dt)
    if padded:
        # zero pad contributes n_pad*mu^2 / n_pad*mu_o*mu_t: remove in closed form (no masks)
        n_pad = jnp.float32(R * _LANES - hw_real)
        sumsq_o = sumsq_o - n_pad * mu_o * mu_o
        sumsq_t = sumsq_t - n_pad * mu_t * mu_t
        cov = cov - n_pad * mu_o * mu_t

    # ---- KL ------------------------------------------------------------------------------
    # p = (o/omax)/sum(o/omax) == o/sum(o): the omax normalisation cancels, so no second
    # full-array pass / reduction (and nothing held live across a reduction barrier).
    p = o * (1.0 / sum_o)
    q = t * (1.0 / sum_t)
    a = q * jnp.log(q * pl.reciprocal(p + 1e-6, approx=True) + 1e-6)
    b = p * jnp.log(p * pl.reciprocal(q + 1e-6, approx=True) + 1e-6)
    kl_i = jnp.sum(a + b)                     # folded single reduction

    # ---- masked MSE: sum((o/omax - t)^2 / (1.1 - t)); mean taken in the wrapper ---------
    diff = o * (1.0 / o_max) - t
    mse_i = jnp.sum(diff * diff * pl.reciprocal(1.1 - t, approx=True))

    # ---- pack the 8 per-batch scalars on a lane-dense row -------------------------------
    lane_pack = jax.lax.broadcasted_iota(jnp.int32, (1, 1, _LANES), 2)
    row = jnp.zeros((1, 1, _LANES), jnp.float32)
    for idx, v in enumerate((sum_o, sum_t, sumsq_o, sumsq_t, cov, o_max, kl_i, mse_i)):
        row = jnp.where(lane_pack == idx, v, row)
    stats_ref[...] = row


def _compute_stats(o_lane, t_lane, hw_real, padded):
    B, R, L = o_lane.shape
    kernel = functools.partial(_loss_stats_kernel, hw_real=hw_real, padded=padded)
    in_bytes = R * L * (o_lane.dtype.itemsize + t_lane.dtype.itemsize)
    est = 2 * in_bytes + 6 * R * L * 4        # double-buffered inputs + f32 temps
    # TODO(synk): for very large maps on v7x (64 MiB physical VMEM) switch to an HW-tiled
    # two-phase grid with scratch accumulators instead of one whole-HW block per batch.
    return pl.pallas_call(
        kernel,
        out_shape=jax.ShapeDtypeStruct((B, 1, _LANES), jnp.float32),
        grid_spec=pltpu.PrefetchScalarGridSpec(
            num_scalar_prefetch=0,
            grid=(B,),
            in_specs=[
                pl.BlockSpec((1, R, L), lambda i: (i, 0, 0)),   # o_i
                pl.BlockSpec((1, R, L), lambda i: (i, 0, 0)),   # label_i
            ],
            out_specs=pl.BlockSpec((1, 1, _LANES), lambda i: (i, 0, 0)),
        ),
        compiler_params=pltpu.CompilerParams(
            dimension_semantics=("parallel",),      # independent per-batch blocks
            vmem_limit_bytes=_maybe_vmem_limit(est)),
    )(o_lane, t_lane)


# --------------------------------------------------------------------------------------
# Fused NSS cross-batch kernel: stream o / t / f once, accumulate M (B,B) + gsum (B,)
# --------------------------------------------------------------------------------------
def _nss_cross_kernel(o_ref, t_ref, f_ref, m_ref, gsum_ref):
    # o_ref/t_ref/f_ref : (B, TK) flat HW tiles (native dtype)
    # m_ref             : (B, B)  running Gram matrix  M[i,j] = sum_hw o_i * (f_j * t_j)
    # gsum_ref          : (B, 1)  running sum_hw (f_j * t_j)
    @pl.when(pl.program_id(0) == 0)
    def _():
        m_ref[...] = jnp.zeros_like(m_ref)
        gsum_ref[...] = jnp.zeros_like(gsum_ref)

    o = o_ref[...].astype(jnp.float32)
    g = f_ref[...].astype(jnp.float32) * t_ref[...].astype(jnp.float32)
    m_ref[...] += jax.lax.dot_general(                       # MXU: o @ g^T over this tile
        o, g, dimension_numbers=(((1,), (1,)), ((), ())),
        preferred_element_type=jnp.float32)
    gsum_ref[...] += jnp.sum(g, axis=1, keepdims=True)


def _nss_cross_terms(o_flat, t_flat, f_flat):
    B, HWp = o_flat.shape
    R = HWp // _LANES
    tr = _largest_divisor_leq(R, _NSS_MAX_TILE_ROWS)
    TK = tr * _LANES
    T = HWp // TK
    rows_pad = ((B + 7) // 8) * 8             # sublane padding of the (B, TK) VMEM block
    itemsizes = (o_flat.dtype.itemsize + t_flat.dtype.itemsize + f_flat.dtype.itemsize)
    est = 2 * rows_pad * TK * itemsizes + 2 * rows_pad * TK * 4
    m, gsum = pl.pallas_call(
        _nss_cross_kernel,
        out_shape=(jax.ShapeDtypeStruct((B, B), jnp.float32),
                   jax.ShapeDtypeStruct((B, 1), jnp.float32)),
        grid_spec=pltpu.PrefetchScalarGridSpec(
            num_scalar_prefetch=0,
            grid=(T,),
            in_specs=[
                pl.BlockSpec((B, TK), lambda k: (0, k)),
                pl.BlockSpec((B, TK), lambda k: (0, k)),
                pl.BlockSpec((B, TK), lambda k: (0, k)),
            ],
            out_specs=[
                pl.BlockSpec((B, B), lambda k: (0, 0)),   # VMEM-resident accumulators
                pl.BlockSpec((B, 1), lambda k: (0, 0)),
            ],
        ),
        compiler_params=pltpu.CompilerParams(
            dimension_semantics=("arbitrary",),
            vmem_limit_bytes=_maybe_vmem_limit(est)),
    )(o_flat, t_flat, f_flat)
    return m, gsum[:, 0]


# --------------------------------------------------------------------------------------
# Wrapper (forward-pass semantics of ModMSE_KL_CC_NSS_Loss.forward)
# --------------------------------------------------------------------------------------
class _Cfg:
    class LOSS:
        KL_ALPHA = 1.0
        CC_ALPHA = 1.0
        NSS_ALPHA = 1.0
        MSE_ALPHA = 1.0


def modmse_kl_cc_nss_loss(outputs, label, fixmap, cfg=_Cfg):
    """JAX/Pallas port of ModMSE_KL_CC_NSS_Loss.forward (forward only)."""
    # TODO(synk): forward-only port; training gradients need a custom_vjp (or a plain-JAX
    # fallback) around the pallas_calls.
    if isinstance(outputs, (list, tuple)):
        output, prior = outputs
    else:
        output, prior = outputs, None

    B, C, H, W = output.shape
    assert C == 1, "saliency output expected to have a single channel"
    HW = H * W

    # Keep native dtype (bf16/f16/f32) — the kernels up-cast per VMEM tile.
    o_flat = output[:, 0, :, :].reshape(B, HW)
    t_flat = label.reshape(B, HW)
    f_flat = fixmap.reshape(B, HW)

    # Lane-dense layout: pad only to a multiple of 128 lanes; skip entirely when aligned.
    HW_pad = ((HW + _LANES - 1) // _LANES) * _LANES
    padded = HW_pad != HW
    if padded:
        pad = ((0, 0), (0, HW_pad - HW))
        o_p = jnp.pad(o_flat, pad)
        t_p = jnp.pad(t_flat, pad)
        f_p = jnp.pad(f_flat, pad)
    else:
        o_p, t_p, f_p = o_flat, t_flat, f_flat
    R = HW_pad // _LANES
    o_lane = o_p.reshape(B, R, _LANES)        # free (row-major compatible) reshape
    t_lane = t_p.reshape(B, R, _LANES)

    stats = _compute_stats(o_lane, t_lane, HW, padded)
    sum_o = stats[:, 0, 0]
    sumsq_o = stats[:, 0, 2]
    sumsq_t = stats[:, 0, 3]
    cov = stats[:, 0, 4]
    kl_per_b = stats[:, 0, 6]
    mse_per_b = stats[:, 0, 7]

    n = jnp.float32(HW)
    mu_o = sum_o / n
    var_o = sumsq_o / n
    var_t = sumsq_t / n
    so = jnp.sqrt(var_o + _EPS_IN)
    st = jnp.sqrt(var_t + _EPS_IN)

    # ---- CC from centered moments (no on/tn tiles ever materialized) -------------------
    num = cov / (so * st)
    out_sq = sumsq_o / (var_o + _EPS_IN)
    tar_sq = sumsq_t / (var_t + _EPS_IN)
    cc_per_b = num / (jnp.sqrt(out_sq * tar_sq) + 1e-6)
    cc_score = jnp.mean(cc_per_b)
    cc_score = jnp.where(jnp.isnan(cc_score) | (cc_score < 0), 0.0, cc_score)
    loss_CC = 1.0 - cc_score

    # ---- KL: (a.sum()+b.sum())/(B*2) with nan guard -------------------------------------
    kl_score = jnp.sum(kl_per_b) / (B * 2.0)
    loss_KL = jnp.where(jnp.isnan(kl_score), 0.0, kl_score)

    # ---- NSS: cross-batch (B,B) term fused in the streaming Pallas pass + affine fixup --
    # sum_hw(on_i * g_j) = (M[i,j] - mu_i * gsum_j) / sqrt(var_i + eps)
    M, gsum = _nss_cross_terms(o_p, t_p, f_p)
    S = (M - mu_o[:, None] * gsum[None, :]) / so[:, None]
    nss_score = jnp.mean(S / gsum[None, :])
    nss_score = jnp.where(jnp.isnan(nss_score), 0.0, nss_score)
    loss_NSS = -nss_score

    # ---- masked MSE: mean over (B, 1, H, W) ----------------------------------------------
    loss_MSE = jnp.sum(mse_per_b) / (B * C * H * W)

    total = (loss_KL * cfg.LOSS.KL_ALPHA + loss_CC * cfg.LOSS.CC_ALPHA
             + loss_NSS * cfg.LOSS.NSS_ALPHA + loss_MSE * cfg.LOSS.MSE_ALPHA)

    if prior is not None:
        # TODO(synk): prior-regularization branch handled in plain-JAX glue (tiny reduce).
        ph, pw = prior.shape[-2], prior.shape[-1]
        loss_prior = jnp.sum((1.0 / (ph * pw)) * prior.astype(jnp.float32) ** 2)
        total = total + loss_prior / 100.0

    return total, (loss_KL, loss_CC, loss_NSS, loss_MSE)


# --------------------------------------------------------------------------------------
# Pure-jnp reference (mirror of the torch forward) for verification
# --------------------------------------------------------------------------------------
def _reference_loss(output, label, fixmap, cfg=_Cfg):
    B, C, H, W = output.shape
    t4 = label[:, None]

    def inorm(x):
        mu = x.mean(axis=(2, 3), keepdims=True)
        var = x.var(axis=(2, 3), keepdims=True)
        return (x - mu) / jnp.sqrt(var + _EPS_IN)

    # CC
    on = inorm(output)
    tn = inorm(t4)
    num = (on * tn).sum(axis=(2, 3))
    osq = (on * on).sum(axis=(2, 3))
    tsq = (tn * tn).sum(axis=(2, 3))
    cc = (num / (jnp.sqrt(osq * tsq) + 1e-6)).mean()
    cc = jnp.where(jnp.isnan(cc) | (cc < 0), 0.0, cc)
    # KL
    omax = output.max(axis=(2, 3), keepdims=True)
    p = output / omax
    p = p / p.sum(axis=(2, 3), keepdims=True)
    q = t4 / t4.sum(axis=(2, 3), keepdims=True)
    kl = ((q * jnp.log(q / (p + 1e-6) + 1e-6)).sum()
          + (p * jnp.log(p / (q + 1e-6) + 1e-6)).sum()) / (B * 2.0)
    kl = jnp.where(jnp.isnan(kl), 0.0, kl)
    # NSS (cross-batch broadcast, same as torch with 3-D label/fixmap)
    sal = on * fixmap * label            # (B, B, H, W)
    fm = fixmap * label                  # (B, H, W)
    nss = (sal.sum(axis=(-1, -2)) / fm.sum(axis=(-1, -2))).mean()
    nss = jnp.where(jnp.isnan(nss), 0.0, nss)
    # MSE
    mse = jnp.mean((output / omax - t4) ** 2 / (1.0 - t4 + 0.1))
    return (kl * cfg.LOSS.KL_ALPHA + (1.0 - cc) * cfg.LOSS.CC_ALPHA
            + (-nss) * cfg.LOSS.NSS_ALPHA + mse * cfg.LOSS.MSE_ALPHA)


if __name__ == "__main__":
    B, C, H, W = 2, 1, 32, 32
    key = jax.random.PRNGKey(0)
    k1, k2, k3 = jax.random.split(key, 3)
    output = jax.random.uniform(k1, (B, C, H, W), jnp.float32, minval=0.05, maxval=1.0)
    label = jax.random.uniform(k2, (B, H, W), jnp.float32, minval=0.05, maxval=1.0)
    fixmap = jax.random.uniform(k3, (B, H, W), jnp.float32, minval=0.0, maxval=1.0)

    total, (l_kl, l_cc, l_nss, l_mse) = modmse_kl_cc_nss_loss(output, label, fixmap)
    total = jax.block_until_ready(total)

    ref_total = jax.block_until_ready(_reference_loss(output, label, fixmap))
    np.testing.assert_allclose(np.asarray(total), np.asarray(ref_total),
                               rtol=5e-3, atol=5e-3)

    _ = '\t(KL:{:.3f} CC:{:.3f} NSS:{:.3f} MSE:{:.3f})'.format(
        float(l_kl), float(1.0 - float(l_cc)), float(-float(l_nss)), float(l_mse))
    print("KERNEL_OK")
</pallas_src>

<mosaic_0001>
module attributes {stable_mosaic.version = 11 : i64} {
  func.func @_loss_stats_kernel(%arg0: i32, %arg1: memref<1x8x128xf32, #tpu.memory_space<vmem>>, %arg2: memref<1x8x128xf32, #tpu.memory_space<vmem>>, %arg3: memref<1x1x128xf32, #tpu.memory_space<vmem>>) attributes {dimension_semantics = [#tpu.dimension_semantics<parallel>], iteration_bounds = array<i64: 2>, scalar_prefetch = 0 : i64, scratch_operands = 0 : i64, tpu.core_type = #tpu.core_type<tc>, window_params = [{transform_indices = @transform_0, window_bounds = array<i64: 1, 8, 128>}, {transform_indices = @transform_1, window_bounds = array<i64: 1, 8, 128>}, {transform_indices = @transform_2, window_bounds = array<i64: 1, 1, 128>}]} {
    %c0 = arith.constant 0 : index
    %c0_0 = arith.constant 0 : index
    %c0_1 = arith.constant 0 : index
    %0 = vector.load %arg1[%c0, %c0_0, %c0_1] : memref<1x8x128xf32, #tpu.memory_space<vmem>>, vector<1x8x128xf32>
    %1 = vector.shape_cast %0 : vector<1x8x128xf32> to vector<8x128xf32>
    %c0_2 = arith.constant 0 : index
    %c0_3 = arith.constant 0 : index
    %c0_4 = arith.constant 0 : index
    %2 = vector.load %arg2[%c0_2, %c0_3, %c0_4] : memref<1x8x128xf32, #tpu.memory_space<vmem>>, vector<1x8x128xf32>
    %3 = vector.shape_cast %2 : vector<1x8x128xf32> to vector<8x128xf32>
    %4 = vector.shape_cast %1 : vector<8x128xf32> to vector<1x8x128xf32>
    %cst = arith.constant dense<0.000000e+00> : vector<1xf32>
    %5 = vector.multi_reduction <add>, %4, %cst [1, 2] : vector<1x8x128xf32> to vector<1xf32>
    %6 = vector.shape_cast %5 : vector<1xf32> to vector<1x1x1xf32>
    %7 = vector.extract %6[0, 0, 0] : f32 from vector<1x1x1xf32>
    %8 = vector.shape_cast %3 : vector<8x128xf32> to vector<1x8x128xf32>
    %cst_5 = arith.constant dense<0.000000e+00> : vector<1xf32>
    %9 = vector.multi_reduction <add>, %8, %cst_5 [1, 2] : vector<1x8x128xf32> to vector<1xf32>
    %10 = vector.shape_cast %9 : vector<1xf32> to vector<1x1x1xf32>
    %11 = vector.extract %10[0, 0, 0] : f32 from vector<1x1x1xf32>
    %12 = vector.shape_cast %1 : vector<8x128xf32> to vector<1x8x128xf32>
    %cst_6 = arith.constant dense<0xFF800000> : vector<1xf32>
    %13 = vector.multi_reduction <maximumf>, %12, %cst_6 [1, 2] : vector<1x8x128xf32> to vector<1xf32>
    %14 = vector.shape_cast %13 : vector<1xf32> to vector<1x1x1xf32>
    %15 = vector.extract %14[0, 0, 0] : f32 from vector<1x1x1xf32>
    %cst_7 = arith.constant 9.765625E-4 : f32
    %16 = arith.mulf %7, %cst_7 : f32
    %cst_8 = arith.constant 9.765625E-4 : f32
    %17 = arith.mulf %11, %cst_8 : f32
    %18 = vector.broadcast %16 : f32 to vector<8x128xf32>
    %19 = arith.subf %1, %18 : vector<8x128xf32>
    %20 = vector.broadcast %17 : f32 to vector<8x128xf32>
    %21 = arith.subf %3, %20 : vector<8x128xf32>
    %22 = arith.mulf %19, %19 : vector<8x128xf32>
    %23 = vector.shape_cast %22 : vector<8x128xf32> to vector<1x8x128xf32>
    %cst_9 = arith.constant dense<0.000000e+00> : vector<1xf32>
    %24 = vector.multi_reduction <add>, %23, %cst_9 [1, 2] : vector<1x8x128xf32> to vector<1xf32>
    %25 = vector.shape_cast %24 : vector<1xf32> to vector<1x1x1xf32>
    %26 = vector.extract %25[0, 0, 0] : f32 from vector<1x1x1xf32>
    %27 = arith.mulf %21, %21 : vector<8x128xf32>
    %28 = vector.shape_cast %27 : vector<8x128xf32> to vector<1x8x128xf32>
    %cst_10 = arith.constant dense<0.000000e+00> : vector<1xf32>
    %29 = vector.multi_reduction <add>, %28, %cst_10 [1, 2] : vector<1x8x128xf32> to vector<1xf32>
    %30 = vector.shape_cast %29 : vector<1xf32> to vector<1x1x1xf32>
    %31 = vector.extract %30[0, 0, 0] : f32 from vector<1x1x1xf32>
    %32 = arith.mulf %19, %21 : vector<8x128xf32>
    %33 = vector.shape_cast %32 : vector<8x128xf32> to vector<1x8x128xf32>
    %cst_11 = arith.constant dense<0.000000e+00> : vector<1xf32>
    %34 = vector.multi_reduction <add>, %33, %cst_11 [1, 2] : vector<1x8x128xf32> to vector<1xf32>
    %35 = vector.shape_cast %34 : vector<1xf32> to vector<1x1x1xf32>
    %36 = vector.extract %35[0, 0, 0] : f32 from vector<1x1x1xf32>
    %cst_12 = arith.constant 1.000000e+00 : f32
    %37 = arith.divf %cst_12, %7 : f32
    %38 = vector.broadcast %37 : f32 to vector<8x128xf32>
    %39 = arith.mulf %1, %38 : vector<8x128xf32>
    %cst_13 = arith.constant 1.000000e+00 : f32
    %40 = arith.divf %cst_13, %11 : f32
    %41 = vector.broadcast %40 : f32 to vector<8x128xf32>
    %42 = arith.mulf %3, %41 : vector<8x128xf32>
    %cst_14 = arith.constant 9.99999997E-7 : f32
    %43 = vector.broadcast %cst_14 : f32 to vector<8x128xf32>
    %44 = arith.addf %39, %43 : vector<8x128xf32>
    %45 = tpu.reciprocal %44 {approx = true} : vector<8x128xf32> -> vector<8x128xf32>
    %46 = arith.mulf %42, %45 : vector<8x128xf32>
    %cst_15 = arith.constant 9.99999997E-7 : f32
    %47 = vector.broadcast %cst_15 : f32 to vector<8x128xf32>
    %48 = arith.addf %46, %47 : vector<8x128xf32>
    %49 = math.log %48 : vector<8x128xf32>
    %50 = arith.mulf %42, %49 : vector<8x128xf32>
    %cst_16 = arith.constant 9.99999997E-7 : f32
    %51 = vector.broadcast %cst_16 : f32 to vector<8x128xf32>
    %52 = arith.addf %42, %51 : vector<8x128xf32>
    %53 = tpu.reciprocal %52 {approx = true} : vector<8x128xf32> -> vector<8x128xf32>
    %54 = arith.mulf %39, %53 : vector<8x128xf32>
    %cst_17 = arith.constant 9.99999997E-7 : f32
    %55 = vector.broadcast %cst_17 : f32 to vector<8x128xf32>
    %56 = arith.addf %54, %55 : vector<8x128xf32>
    %57 = math.log %56 : vector<8x128xf32>
    %58 = arith.mulf %39, %57 : vector<8x128xf32>
    %59 = arith.addf %50, %58 : vector<8x128xf32>
    %60 = vector.shape_cast %59 : vector<8x128xf32> to vector<1x8x128xf32>
    %cst_18 = arith.constant dense<0.000000e+00> : vector<1xf32>
    %61 = vector.multi_reduction <add>, %60, %cst_18 [1, 2] : vector<1x8x128xf32> to vector<1xf32>
    %62 = vector.shape_cast %61 : vector<1xf32> to vector<1x1x1xf32>
    %63 = vector.extract %62[0, 0, 0] : f32 from vector<1x1x1xf32>
    %cst_19 = arith.constant 1.000000e+00 : f32
    %64 = arith.divf %cst_19, %15 : f32
    %65 = vector.broadcast %64 : f32 to vector<8x128xf32>
    %66 = arith.mulf %1, %65 : vector<8x128xf32>
    %67 = arith.subf %66, %3 : vector<8x128xf32>
    %68 = arith.mulf %67, %67 : vector<8x128xf32>
    %cst_20 = arith.constant 1.100000e+00 : f32
    %69 = vector.broadcast %cst_20 : f32 to vector<8x128xf32>
    %70 = arith.subf %69, %3 : vector<8x128xf32>
    %71 = tpu.reciprocal %70 {approx = true} : vector<8x128xf32> -> vector<8x128xf32>
    %72 = arith.mulf %68, %71 : vector<8x128xf32>
    %73 = vector.shape_cast %72 : vector<8x128xf32> to vector<1x8x128xf32>
    %cst_21 = arith.constant dense<0.000000e+00> : vector<1xf32>
    %74 = vector.multi_reduction <add>, %73, %cst_21 [1, 2] : vector<1x8x128xf32> to vector<1xf32>
    %75 = vector.shape_cast %74 : vector<1xf32> to vector<1x1x1xf32>
    %76 = vector.extract %75[0, 0, 0] : f32 from vector<1x1x1xf32>
    %77 = tpu.iota {dimensions = array<i32: 2>} : vector<1x1x128xi32>
    %cst_22 = arith.constant 0.000000e+00 : f32
    %78 = vector.broadcast %cst_22 : f32 to vector<1x1x128xf32>
    %c0_i32 = arith.constant 0 : i32
    %79 = vector.broadcast %c0_i32 : i32 to vector<1x1x128xi32>
    %80 = arith.cmpi eq, %77, %79 : vector<1x1x128xi32>
    %81 = vector.broadcast %7 : f32 to vector<1x1x128xf32>
    %82 = arith.select %80, %81, %78 : vector<1x1x128xi1>, vector<1x1x128xf32>
    %c1_i32 = arith.constant 1 : i32
    %83 = vector.broadcast %c1_i32 : i32 to vector<1x1x128xi32>
    %84 = arith.cmpi eq, %77, %83 : vector<1x1x128xi32>
    %85 = vector.broadcast %11 : f32 to vector<1x1x128xf32>
    %86 = arith.select %84, %85, %82 : vector<1x1x128xi1>, vector<1x1x128xf32>
    %c2_i32 = arith.constant 2 : i32
    %87 = vector.broadcast %c2_i32 : i32 to vector<1x1x128xi32>
    %88 = arith.cmpi eq, %77, %87 : vector<1x1x128xi32>
    %89 = vector.broadcast %26 : f32 to vector<1x1x128xf32>
    %90 = arith.select %88, %89, %86 : vector<1x1x128xi1>, vector<1x1x128xf32>
    %c3_i32 = arith.constant 3 : i32
    %91 = vector.broadcast %c3_i32 : i32 to vector<1x1x128xi32>
    %92 = arith.cmpi eq, %77, %91 : vector<1x1x128xi32>
    %93 = vector.broadcast %31 : f32 to vector<1x1x128xf32>
    %94 = arith.select %92, %93, %90 : vector<1x1x128xi1>, vector<1x1x128xf32>
    %c4_i32 = arith.constant 4 : i32
    %95 = vector.broadcast %c4_i32 : i32 to vector<1x1x128xi32>
    %96 = arith.cmpi eq, %77, %95 : vector<1x1x128xi32>
    %97 = vector.broadcast %36 : f32 to vector<1x1x128xf32>
    %98 = arith.select %96, %97, %94 : vector<1x1x128xi1>, vector<1x1x128xf32>
    %c5_i32 = arith.constant 5 : i32
    %99 = vector.broadcast %c5_i32 : i32 to vector<1x1x128xi32>
    %100 = arith.cmpi eq, %77, %99 : vector<1x1x128xi32>
    %101 = vector.broadcast %15 : f32 to vector<1x1x128xf32>
    %102 = arith.select %100, %101, %98 : vector<1x1x128xi1>, vector<1x1x128xf32>
    %c6_i32 = arith.constant 6 : i32
    %103 = vector.broadcast %c6_i32 : i32 to vector<1x1x128xi32>
    %104 = arith.cmpi eq, %77, %103 : vector<1x1x128xi32>
    %105 = vector.broadcast %63 : f32 to vector<1x1x128xf32>
    %106 = arith.select %104, %105, %102 : vector<1x1x128xi1>, vector<1x1x128xf32>
    %c7_i32 = arith.constant 7 : i32
    %107 = vector.broadcast %c7_i32 : i32 to vector<1x1x128xi32>
    %108 = arith.cmpi eq, %77, %107 : vector<1x1x128xi32>
    %109 = vector.broadcast %76 : f32 to vector<1x1x128xf32>
    %110 = arith.select %108, %109, %106 : vector<1x1x128xi1>, vector<1x1x128xf32>
    %c0_23 = arith.constant 0 : index
    %c0_24 = arith.constant 0 : index
    %c0_25 = arith.constant 0 : index
    %111 = vector.load %arg3[%c0_23, %c0_24, %c0_25] : memref<1x1x128xf32, #tpu.memory_space<vmem>>, vector<1x1x128xf32>
    tpu.vector_store %arg3[%c0_23, %c0_24, %c0_25], %110 {strides = array<i32>} : memref<1x1x128xf32, #tpu.memory_space<vmem>>, vector<1x1x128xf32>,
    return
  }
  func.func @transform_0(%arg0: i32) -> (i32, i32, i32) {
    %c0_i32 = arith.constant 0 : i32
    %c0_i32_0 = arith.constant 0 : i32
    %c0_i32_1 = arith.constant 0 : i32
    return %arg0, %c0_i32, %c0_i32_0 : i32, i32, i32
  }
  func.func @transform_1(%arg0: i32) -> (i32, i32, i32) {
    %c0_i32 = arith.constant 0 : i32
    %c0_i32_0 = arith.constant 0 : i32
    %c0_i32_1 = arith.constant 0 : i32
    return %arg0, %c0_i32, %c0_i32_0 : i32, i32, i32
  }
  func.func @transform_2(%arg0: i32) -> (i32, i32, i32) {
    %c0_i32 = arith.constant 0 : i32
    %c0_i32_0 = arith.constant 0 : i32
    %c0_i32_1 = arith.constant 0 : i32
    return %arg0, %c0_i32, %c0_i32_0 : i32, i32, i32
  }
}

</mosaic_0001>

<llo_original>
// kernel: tpu_custom_call.1
$region0: #{tpu_custom_call.1}
  #allocation0 [shape = 'u32[]', space=smem, size = 0x4, offset = 0x4, fixed_abs, tag = 'smem constant byte address 0x4 - core index']
  #allocation1 [shape = 'u32[72,128]{1,0:T(1,128)}', space=vmem, size = 0x9000, scoped, tag = 'internal scratch']
  %s0 = inlined_call_operand.hbm [shape: f32[2,8,128], index: 0, kind: input, shape index: {}]
  %s1 = inlined_call_operand.hbm [shape: f32[2,8,128], index: 1, kind: input, shape index: {}]
  %s2 = inlined_call_operand.hbm [shape: f32[2,1,128], index: 2, kind: output, shape index: {}]
  %s3 = sld [smem:[#allocation0]]
  $region49: #{tpu_custom_call.1} parent=0
    _
  %s5 = ssub.s32 1, %s3
  %s6 = scalar_select 0, %s5, %s3
  $region1: #{tpu_custom_call.1} parent=0
    #allocation2 [shape = 'u8[8192]{0}', space=vmem, size = 0x2000, scoped, tag = 'input window, operand 0']
    #allocation3 [shape = 's32[2]{0}', space=sflag, size = 0x8, scoped, tag = 'scoped memory for tpu_custom_call.1']
    #allocation4 [shape = 's32[2]{0}', space=sflag, size = 0x8, scoped, tag = 'scoped memory for tpu_custom_call.1']
    #allocation5 [shape = 'u8[8192]{0}', space=vmem, size = 0x2000, scoped, tag = 'input window, operand 1']
    #allocation6 [shape = 's32[2]{0}', space=sflag, size = 0x8, scoped, tag = 'scoped memory for tpu_custom_call.1']
    #allocation7 [shape = 'u8[1024]{0}', space=vmem, size = 0x400, scoped, tag = 'output window, operand 0']
    %7 = vsyncpa [#allocation3], 0
    %s8 = scalar_lea.sflag [#allocation3], 1
    %9 = vsyncpa %s8, 0
    %10 = vsyncpa [#allocation6], 0
    %s11 = scalar_lea.sflag [#allocation6], 1
    %12 = vsyncpa %s11, 0
    %13 = vsyncpa [#allocation4], 0
    %s14 = scalar_lea.sflag [#allocation4], 1
    %15 = vsyncpa %s14, 0
    loop: start=0, step=1, limit=4
    $region2: #{tpu_custom_call.1} parent=1 // loop_pre_header
      _
    $region3: #{tpu_custom_call.1} parent=1 // loop_header
      %s17 = sphi 0, %s21
      %p18 = scmp.ge.s32.totalorder %s17, 4
      %s27 = sphi 0, %s29
      %s30 = sphi 0, %s27
      %s31 = sphi 0, %s30
      %s47 = sphi 0, %s31
      %s53 = sphi 0, %s55
      %s56 = sphi 0, %s53
      %s57 = sphi 0, %s56
      %s73 = sphi 0, %s57
      %s79 = sphi 0, %s81
      %s82 = sphi 0, %s79
      %s83 = sphi 0, %s82
      %s99 = sphi 0, %s83
    $region4: #{tpu_custom_call.1} parent=1 // loop_header_branch
      %20 = sbr.rel (%p18) target = $region8
    $region5: #{tpu_custom_call.1} parent=1 // loop_body
      %s22 = ssub.s32 %s17, 1
      %s23 = ssub.s32 %s17, 2
      %s24 = sadd.s32 %s17, 1
      %s25 = ssub.s32 %s17, %s24
      %p26 = scmp.eq.s32.totalorder %s25, 0
      %s28 = sadd.s32 %s27, 1
      %s29 = scalar_select %p26, %s27, %s28
      %p32 = pneg %p26
      %p33 = scmp.eq.s32.totalorder %s17, 1
      %p34 = por %p32, %p33
      %p35 = scmp.ne.s32.totalorder %s27, %s30
      %p36 = scmp.eq.s32.totalorder %s17, 0
      %p37 = por %p35, %p36
      %p38 = scmp.ne.s32.totalorder %s27, %s30
      %p39 = scmp.eq.s32.totalorder %s22, 1
      %p40 = por %p38, %p39
      %p41 = scmp.ne.s32.totalorder %s30, %s31
      %p42 = scmp.eq.s32.totalorder %s22, 0
      %p43 = por %p41, %p42
      %p44 = scmp.ne.s32.totalorder %s30, %s31
      %p45 = scmp.eq.s32.totalorder %s23, 1
      %p46 = por %p44, %p45
      %p48 = scmp.ne.s32.totalorder %s31, %s47
      %p49 = scmp.eq.s32.totalorder %s23, 0
      %p50 = por %p48, %p49
      %s51 = ssub.s32 %s17, %s24
      %p52 = scmp.eq.s32.totalorder %s51, 0
      %s54 = sadd.s32 %s53, 1
      %s55 = scalar_select %p52, %s53, %s54
      %p58 = pneg %p52
      %p59 = scmp.eq.s32.totalorder %s17, 1
      %p60 = por %p58, %p59
      %p61 = scmp.ne.s32.totalorder %s53, %s56
      %p62 = scmp.eq.s32.totalorder %s17, 0
      %p63 = por %p61, %p62
      %p64 = scmp.ne.s32.totalorder %s53, %s56
      %p65 = scmp.eq.s32.totalorder %s22, 1
      %p66 = por %p64, %p65
      %p67 = scmp.ne.s32.totalorder %s56, %s57
      %p68 = scmp.eq.s32.totalorder %s22, 0
      %p69 = por %p67, %p68
      %p70 = scmp.ne.s32.totalorder %s56, %s57
      %p71 = scmp.eq.s32.totalorder %s23, 1
      %p72 = por %p70, %p71
      %p74 = scmp.ne.s32.totalorder %s57, %s73
      %p75 = scmp.eq.s32.totalorder %s23, 0
      %p76 = por %p74, %p75
      %s77 = ssub.s32 %s17, %s24
      %p78 = scmp.eq.s32.totalorder %s77, 0
      %s80 = sadd.s32 %s79, 1
      %s81 = scalar_select %p78, %s79, %s80
      %p84 = pneg %p78
      %p85 = scmp.eq.s32.totalorder %s17, 1
      %p86 = por %p84, %p85
      %p87 = scmp.ne.s32.totalorder %s79, %s82
      %p88 = scmp.eq.s32.totalorder %s17, 0
      %p89 = por %p87, %p88
      %p90 = scmp.ne.s32.totalorder %s79, %s82
      %p91 = scmp.eq.s32.totalorder %s22, 1
      %p92 = por %p90, %p91
      %p93 = scmp.ne.s32.totalorder %s82, %s83
      %p94 = scmp.eq.s32.totalorder %s22, 0
      %p95 = por %p93, %p94
      %p96 = scmp.ne.s32.totalorder %s82, %s83
      %p97 = scmp.eq.s32.totalorder %s23, 1
      %p98 = por %p96, %p97
      %p100 = scmp.ne.s32.totalorder %s83, %s99
      %p101 = scmp.eq.s32.totalorder %s23, 0
      %p102 = por %p100, %p101
      %p103 = scmp.le.s32.totalorder 1, %s17
      %p104 = scmp.lt.s32.totalorder %s17, 3
      %p105 = pnand %p103, %p104
      %p106 = pneg %p105
      // Predicated region
      $region9: #{tpu_custom_call.1} parent=5 // pred_check
        _
      $region10: #{tpu_custom_call.1} parent=5 // pred_check_branch
        %108 = sbr.rel (%p105) target = $region12
      $region11: #{tpu_custom_call.1} parent=5 // pred_region
        %s109 = ssub.s32 %s17, 1
      $region12: #{tpu_custom_call.1} parent=5 // pred_fallthru
        _
      %p110 = scmp.lt.s32.totalorder %s17, 2
      // Predicated region
      $region13: #{tpu_custom_call.1} parent=5 // pred_check
        %p111 = pneg %p110
      $region14: #{tpu_custom_call.1} parent=5 // pred_check_branch
        %113 = sbr.rel (%p111) target = $region16
      $region15: #{tpu_custom_call.1} parent=5 // pred_region
        // Predicated region
        $region17: #{tpu_custom_call.1} parent=15 // pred_check
          %p114 = pneg %p37
        $region18: #{tpu_custom_call.1} parent=15 // pred_check_branch
          %116 = sbr.rel (%p114) target = $region20
        $region19: #{tpu_custom_call.1} parent=15 // pred_region
          %s117 = sand.u32 %s27, 1
          %s118 = scalar_lea.sflag [#allocation3], %s117
          %s119 = sand.u32 %s27, 1
          %s120 = smul.addr %s119, 8
          %s121 = scalar_lea.vmem [#allocation2], %s120
          %123 = vsyncadd %s118, 0
          %s124 = smul.addr %s17, 8
          %s125 = scalar_lea.hbm %s0, %s124
          %s127 = sshll.u32 %s125, 4
          %s128 = int_to_ptr.hbm [resolvable:$true] %s127
          %s129 = sshll.u32 %s121, 4
          %s130 = int_to_ptr.vmem [resolvable:$true] %s129
          %132 = dma.hbm_to_vmem [thread:$0]  %s128, 128, %s130, %s118
        $region20: #{tpu_custom_call.1} parent=15 // pred_fallthru
          _
        // Predicated region
        $region21: #{tpu_custom_call.1} parent=15 // pred_check
          %p133 = pneg %p63
        $region22: #{tpu_custom_call.1} parent=15 // pred_check_branch
          %135 = sbr.rel (%p133) target = $region24
        $region23: #{tpu_custom_call.1} parent=15 // pred_region
          %s136 = sand.u32 %s53, 1
          %s137 = scalar_lea.sflag [#allocation6], %s136
          %s138 = sand.u32 %s53, 1
          %s139 = smul.addr %s138, 8
          %s140 = scalar_lea.vmem [#allocation5], %s139
          %142 = vsyncadd %s137, 0
          %s143 = smul.addr %s17, 8
          %s144 = scalar_lea.hbm %s1, %s143
          %s146 = sshll.u32 %s144, 4
          %s147 = int_to_ptr.hbm [resolvable:$true] %s146
          %s148 = sshll.u32 %s140, 4
          %s149 = int_to_ptr.vmem [resolvable:$true] %s148
          %151 = dma.hbm_to_vmem [thread:$0]  %s147, 128, %s149, %s137
        $region24: #{tpu_custom_call.1} parent=15 // pred_fallthru
          _
      $region16: #{tpu_custom_call.1} parent=5 // pred_fallthru
        _
      %p152 = scmp.le.s32.totalorder 1, %s17
      %p153 = scmp.lt.s32.totalorder %s17, 3
      %p154 = pnand %p152, %p153
      %p155 = pneg %p154
      // Predicated region
      $region25: #{tpu_custom_call.1} parent=5 // pred_check
        _
      $region26: #{tpu_custom_call.1} parent=5 // pred_check_branch
        %157 = sbr.rel (%p154) target = $region28
      $region27: #{tpu_custom_call.1} parent=5 // pred_region
        %s158 = ssub.s32 %s17, 1
        %s159 = sand.u32 %s30, 1
        %s160 = scalar_lea.sflag [#allocation3], %s159
        %s161 = sand.u32 %s30, 1
        %s162 = smul.addr %s161, 8
        %s163 = scalar_lea.vmem [#allocation2], %s162
        // Predicated region
        $region29: #{tpu_custom_call.1} parent=27 // pred_check
          %p164 = pneg %p43
        $region30: #{tpu_custom_call.1} parent=27 // pred_check_branch
          %166 = sbr.rel (%p164) target = $region32
        $region31: #{tpu_custom_call.1} parent=27 // pred_region
          %168 = dma.done %s160, 128
        $region32: #{tpu_custom_call.1} parent=27 // pred_fallthru
          _
        %s169 = sand.u32 %s56, 1
        %s170 = scalar_lea.sflag [#allocation6], %s169
        %s171 = sand.u32 %s56, 1
        %s172 = smul.addr %s171, 8
        %s173 = scalar_lea.vmem [#allocation5], %s172
        // Predicated region
        $region33: #{tpu_custom_call.1} parent=27 // pred_check
          %p174 = pneg %p69
        $region34: #{tpu_custom_call.1} parent=27 // pred_check_branch
          %176 = sbr.rel (%p174) target = $region36
        $region35: #{tpu_custom_call.1} parent=27 // pred_region
          %178 = dma.done %s170, 128
        $region36: #{tpu_custom_call.1} parent=27 // pred_fallthru
          _
        %s179 = sand.u32 %s30, 1
        %s180 = scalar_lea.sflag [#allocation3], %s179
        %s181 = sand.u32 %s30, 1
        %s182 = smul.addr %s181, 8
        %s183 = scalar_lea.vmem [#allocation2], %s182
        %p184 = pneg %p43
        %p185 = pneg %p40
        %s186 = sand.u32 %s56, 1
        %s187 = scalar_lea.sflag [#allocation6], %s186
        %s188 = sand.u32 %s56, 1
        %s189 = smul.addr %s188, 8
        %s190 = scalar_lea.vmem [#allocation5], %s189
        %p191 = pneg %p69
        %p192 = pneg %p66
        %p193 = pneg %p95
        %p194 = pneg %p92
        %s195 = sand.u32 %s82, 1
        %s196 = scalar_lea.sflag [#allocation4], %s195
        %s197 = sand.u32 %s82, 1
        %s198 = scalar_lea.vmem [#allocation7], %s197
        %v199 = vld [vmem:[%s163] sm:$0xff]
        %v200 = vld [vmem:[%s173] sm:$0xff]
        %201 = vadd.xlane.f32.xlu0 %v199
        %v202 = vpop.xlane.xlu0 %201
        %v203 = vrot.slane %v202, 4
        %v204 = vadd.f32 %v202, %v203
        %v205 = vrot.slane %v204, 2
        %v206 = vadd.f32 %v204, %v205
        %v207 = vrot.slane %v206, 1
        %v208 = vadd.f32 %v206, %v207
        %s209 = vtos %v208
        %210 = vadd.xlane.f32.xlu0 %v200
        %v211 = vpop.xlane.xlu0 %210
        %v212 = vrot.slane %v211, 4
        %v213 = vadd.f32 %v211, %v212
        %v214 = vrot.slane %v213, 2
        %v215 = vadd.f32 %v213, %v214
        %v216 = vrot.slane %v215, 1
        %v217 = vadd.f32 %v215, %v216
        %s218 = vtos %v217
        %219 = vmax.xlane.f32.xlu0 %v199
        %v220 = vpop.xlane.xlu0 %219
        %v221 = vrot.slane %v220, 4
        %v222 = vmax.f32 %v220, %v221
        %v223 = vrot.slane %v222, 2
        %v224 = vmax.f32 %v222, %v223
        %v225 = vrot.slane %v224, 1
        %v226 = vmax.f32 %v224, %v225
        %s227 = vtos %v226
        %s228 = smul.f32 %s209, 0.0009765625
        %s229 = smul.f32 %s218, 0.0009765625
        %v230 = vstv %s228
        %v231 = vsub.f32 %v199, %v230
        %v232 = vstv %s229
        %v233 = vsub.f32 %v200, %v232
        %v234 = vmul.f32 %v231, %v231
        %235 = vadd.xlane.f32.xlu0 %v234
        %v236 = vpop.xlane.xlu0 %235
        %v237 = vrot.slane %v236, 4
        %v238 = vadd.f32 %v236, %v237
        %v239 = vrot.slane %v238, 2
        %v240 = vadd.f32 %v238, %v239
        %v241 = vrot.slane %v240, 1
        %v242 = vadd.f32 %v240, %v241
        %s243 = vtos %v242
        %v244 = vmul.f32 %v233, %v233
        %245 = vadd.xlane.f32.xlu0 %v244
        %v246 = vpop.xlane.xlu0 %245
        %v247 = vrot.slane %v246, 4
        %v248 = vadd.f32 %v246, %v247
        %v249 = vrot.slane %v248, 2
        %v250 = vadd.f32 %v248, %v249
        %v251 = vrot.slane %v250, 1
        %v252 = vadd.f32 %v250, %v251
        %s253 = vtos %v252
        %v254 = vmul.f32 %v231, %v233
        %255 = vadd.xlane.f32.xlu0 %v254
        %v256 = vpop.xlane.xlu0 %255
        %v257 = vrot.slane %v256, 4
        %v258 = vadd.f32 %v256, %v257
        %v259 = vrot.slane %v258, 2
        %v260 = vadd.f32 %v258, %v259
        %v261 = vrot.slane %v260, 1
        %v262 = vadd.f32 %v260, %v261
        %s263 = vtos %v262
        %v264 = vstv %s209
        %v265 = vrcp.pop %v264
        %v266 = vmul.f32 %v264, %v265
        %v267 = vsub.f32 1.0, %v266
        %v268 = vmul.f32 %v265, %v267
        %v269 = vadd.f32 %v265, %v268
        %vm270 = vweird.f32 %v264
        %vm271 = vweird.f32 %v265
        %vm272 = vmor %vm270, %vm271
        %v273 = vsel %vm272, %v265, %v269
        %v274 = vand.u32 2147483647, %v264
        %vm275 = vcmp.eq.f32.partialorder %v274, 8.507059e+37
        %v276 = vand.u32 %v264, 2147483648
        %v277 = vor.u32 1.1754944e-38, %v276
        %v278 = vsel %vm275, %v277, %v273
        %s279 = vtos %v278
        %v280 = vstv %s279
        %v281 = vmul.f32 %v199, %v280
        %v282 = vstv %s218
        %v283 = vrcp.pop %v282
        %v284 = vmul.f32 %v282, %v283
        %v285 = vsub.f32 1.0, %v284
        %v286 = vmul.f32 %v283, %v285
        %v287 = vadd.f32 %v283, %v286
        %vm288 = vweird.f32 %v282
        %vm289 = vweird.f32 %v283
        %vm290 = vmor %vm288, %vm289
        %v291 = vsel %vm290, %v283, %v287
        %v292 = vand.u32 2147483647, %v282
        %vm293 = vcmp.eq.f32.partialorder %v292, 8.507059e+37
        %v294 = vand.u32 %v282, 2147483648
        %v295 = vor.u32 1.1754944e-38, %v294
        %v296 = vsel %vm293, %v295, %v291
        %s297 = vtos %v296
        %v298 = vstv %s297
        %v299 = vmul.f32 %v200, %v298
        %v300 = vadd.f32 %v281, 1e-06
        %v301 = vrcp.pop %v300
        %v302 = vmul.f32 %v299, %v301
        %v303 = vadd.f32 %v302, 1e-06
        %v304 = vlog2.pop %v303
        %v305 = vmul.f32 %v304, 0.6931472
        %v306 = vmul.f32 %v299, %v305
        %v307 = vadd.f32 %v299, 1e-06
        %v308 = vrcp.pop %v307
        %v309 = vmul.f32 %v281, %v308
        %v310 = vadd.f32 %v309, 1e-06
        %v311 = vlog2.pop %v310
        %v312 = vmul.f32 %v311, 0.6931472
        %v313 = vmul.f32 %v281, %v312
        %v314 = vadd.f32 %v306, %v313
        %315 = vadd.xlane.f32.xlu0 %v314
        %v316 = vpop.xlane.xlu0 %315
        %v317 = vrot.slane %v316, 4
        %v318 = vadd.f32 %v316, %v317
        %v319 = vrot.slane %v318, 2
        %v320 = vadd.f32 %v318, %v319
        %v321 = vrot.slane %v320, 1
        %v322 = vadd.f32 %v320, %v321
        %s323 = vtos %v322
        %v324 = vstv %s227
        %v325 = vrcp.pop %v324
        %v326 = vmul.f32 %v324, %v325
        %v327 = vsub.f32 1.0, %v326
        %v328 = vmul.f32 %v325, %v327
        %v329 = vadd.f32 %v325, %v328
        %vm330 = vweird.f32 %v324
        %vm331 = vweird.f32 %v325
        %vm332 = vmor %vm330, %vm331
        %v333 = vsel %vm332, %v325, %v329
        %v334 = vand.u32 2147483647, %v324
        %vm335 = vcmp.eq.f32.partialorder %v334, 8.507059e+37
        %v336 = vand.u32 %v324, 2147483648
        %v337 = vor.u32 1.1754944e-38, %v336
        %v338 = vsel %vm335, %v337, %v333
        %s339 = vtos %v338
        %v340 = vstv %s339
        %v341 = vmul.f32 %v199, %v340
        %v342 = vsub.f32 %v341, %v200
        %v343 = vmul.f32 %v342, %v342
        %v344 = vsub.f32 1.1, %v200
        %v345 = vrcp.pop %v344
        %v346 = vmul.f32 %v343, %v345
        %347 = vadd.xlane.f32.xlu0 %v346
        %v348 = vpop.xlane.xlu0 %347
        %v349 = vrot.slane %v348, 4
        %v350 = vadd.f32 %v348, %v349
        %v351 = vrot.slane %v350, 2
        %v352 = vadd.f32 %v350, %v351
        %v353 = vrot.slane %v352, 1
        %v354 = vadd.f32 %v352, %v353
        %s355 = vtos %v354
        %v356 = vlaneseq
        %v357 = vand.u32 %v356, 127
        %vm358 = vcmp.eq.s32.totalorder %v357, 0
        %v359 = vstv %s209
        %v360 = vsel %vm358, %v359, 0.0
        %vm361 = vcmp.eq.s32.totalorder %v357, 1
        %v362 = vstv %s218
        %v363 = vsel %vm361, %v362, %v360
        %vm364 = vcmp.eq.s32.totalorder %v357, 2
        %v365 = vstv %s243
        %v366 = vsel %vm364, %v365, %v363
        %vm367 = vcmp.eq.s32.totalorder %v357, 3
        %v368 = vstv %s253
        %v369 = vsel %vm367, %v368, %v366
        %vm370 = vcmp.eq.s32.totalorder %v357, 4
        %v371 = vstv %s263
        %v372 = vsel %vm370, %v371, %v369
        %vm373 = vcmp.eq.s32.totalorder %v357, 5
        %v374 = vstv %s227
        %v375 = vsel %vm373, %v374, %v372
        %vm376 = vcmp.eq.s32.totalorder %v357, 6
        %v377 = vstv %s323
        %v378 = vsel %vm376, %v377, %v375
        %vm379 = vcmp.eq.s32.totalorder %v357, 7
        %v380 = vstv %s355
        %v381 = vsel %vm379, %v380, %v378
        %382 = vst [vmem:[%s198] sm:$0x1] %v381
        %s383 = sand.u32 %s82, 1
        %s384 = scalar_lea.sflag [#allocation4], %s383
        %s385 = sand.u32 %s82, 1
        %s386 = scalar_lea.vmem [#allocation7], %s385
        // Predicated region
        $region37: #{tpu_custom_call.1} parent=27 // pred_check
          %p387 = pneg %p92
        $region38: #{tpu_custom_call.1} parent=27 // pred_check_branch
          %389 = sbr.rel (%p387) target = $region40
        $region39: #{tpu_custom_call.1} parent=27 // pred_region
          %391 = vsyncadd %s384, 0
          %s392 = scalar_lea.hbm %s2, %s22
          %s394 = sshll.u32 %s386, 4
          %s395 = int_to_ptr.vmem [resolvable:$true] %s394
          %s396 = sshll.u32 %s392, 4
          %s397 = int_to_ptr.hbm [resolvable:$true] %s396
          %399 = dma.vmem_to_hbm [thread:$0]  %s395, 16, %s397, %s384
        $region40: #{tpu_custom_call.1} parent=27 // pred_fallthru
          _
      $region28: #{tpu_custom_call.1} parent=5 // pred_fallthru
        _
      %p400 = scmp.le.s32.totalorder 2, %s17
      // Predicated region
      $region41: #{tpu_custom_call.1} parent=5 // pred_check
        %p401 = pneg %p400
      $region42: #{tpu_custom_call.1} parent=5 // pred_check_branch
        %403 = sbr.rel (%p401) target = $region44
      $region43: #{tpu_custom_call.1} parent=5 // pred_region
        %s404 = ssub.s32 %s17, 2
        // Predicated region
        $region45: #{tpu_custom_call.1} parent=43 // pred_check
          %p405 = pneg %p98
        $region46: #{tpu_custom_call.1} parent=43 // pred_check_branch
          %407 = sbr.rel (%p405) target = $region48
        $region47: #{tpu_custom_call.1} parent=43 // pred_region
          %s408 = sand.u32 %s83, 1
          %s409 = scalar_lea.sflag [#allocation4], %s408
          %s410 = sand.u32 %s83, 1
          %s411 = scalar_lea.vmem [#allocation7], %s410
          %413 = dma.done %s409, 16
        $region48: #{tpu_custom_call.1} parent=43 // pred_fallthru
          _
      $region44: #{tpu_custom_call.1} parent=5 // pred_fallthru
        _
    $region6: #{tpu_custom_call.1} parent=1 // loop_footer
      %s21 = sadd.s32 1, %s17
    $region7: #{tpu_custom_call.1} parent=1 // loop_footer_branch
      %16 = sbr.rel target = $region3
    $region8: #{tpu_custom_call.1} parent=1 // loop_exit
      _
    %414 = vsyncpa [#allocation3], 1
    %s415 = scalar_lea.sflag [#allocation3], 1
    %416 = vsyncpa %s415, 1
    %417 = vsyncpa [#allocation6], 1
    %s418 = scalar_lea.sflag [#allocation6], 1
    %419 = vsyncpa %s418, 1
    %420 = vsyncpa [#allocation4], 1
    %s421 = scalar_lea.sflag [#allocation4], 1
    %422 = vsyncpa %s421, 1

</llo_original>
